<compile_context>
chip_gen: v7x
topology: tpu7x:2x2x1
jax: 0.10.0
libtpu: 0.0.40
codegen_flags: <defaults>
</compile_context>

<pallas_src>
import jax
import jax.numpy as jnp
from jax import lax
from jax.experimental import pallas as pl
from jax.experimental.pallas import tpu as pltpu


def _round_up(n, m):
    return ((n + m - 1) // m) * m


def _vmem_capacity_bytes():
    try:
        return int(pltpu.get_tpu_info().vmem_capacity_bytes)
    except Exception:
        return 64 * 1024 * 1024  # conservative: v7x per-TensorCore VMEM


def _block_vmem_bytes(tb, tk, tn, itemsize=4):
    """Double-buffered x / w2 / b2 / out blocks + f32 accumulator scratch."""
    x_blk = 2 * tb * tk * itemsize
    w_blk = 2 * tk * tn * itemsize
    b_blk = 2 * 8 * tn * itemsize          # (1, tn) pads to 8 sublanes
    o_blk = 2 * tb * tn * itemsize
    acc = tb * tn * 4
    return x_blk + w_blk + b_blk + o_blk + acc


def _mlp_kernel(x_ref, w_ref, b_ref, o_ref, acc_ref):
    """One (batch, out, k) grid step of y = x @ W2 + b2."""
    k = pl.program_id(2)

    @pl.when(k == 0)
    def _():
        # Fold the bias add into the accumulator init (no per-step VPU add).
        acc_ref[...] = jnp.broadcast_to(
            b_ref[...].astype(jnp.float32), acc_ref.shape)

    acc_ref[...] += jnp.dot(x_ref[...], w_ref[...],
                            preferred_element_type=jnp.float32)

    @pl.when(k == pl.num_programs(2) - 1)
    def _():
        o_ref[...] = acc_ref[...].astype(o_ref.dtype)


def demographic_mlp(x, w2, b2, *,
                    force_pallas=False,
                    compute_dtype=None,
                    tile_k=512,
                    k_tiling_threshold=1024,
                    max_tile_n=512,
                    xla_fallback_elems=1 << 18):
    """DemographicMLP.forward:  y = linear_2(dropout(x)) = x @ W2 + b2.

    x  : (B, input_size)
    w2 : (input_size, output_size)   (transposed vs torch nn.Linear.weight)
    b2 : (output_size,) or (1, output_size)

    w1/b1 are intentionally not taken: per the module's forward() they never
    affect the output, so loading them would only waste HBM bandwidth.
    """
    B, in_dim = x.shape
    K, out_dim = w2.shape
    assert in_dim == K, (
        "DemographicMLP.forward requires input_size == output_size // 2 "
        f"(x feature dim {in_dim} vs w2 rows {K})")
    b2 = jnp.asarray(b2).reshape(1, out_dim)

    # Tiny problems (e.g. the module's nominal B=8, in=16, out=32): the fixed
    # pallas_call / pad / slice cost dwarfs the matmul; a fused XLA dot wins.
    if not force_pallas and (B * K * out_dim) < xla_fallback_elems:
        return (x @ w2 + b2).astype(x.dtype)

    itemsize = 4  # budget conservatively for f32 even if compute_dtype=bf16
    capacity = _vmem_capacity_bytes()
    budget = int(capacity * 0.7)

    # --- K (reduction) tiling: bounds VMEM independent of in_dim -------------
    if K > k_tiling_threshold:
        assert tile_k % 128 == 0, "tile_k must be a multiple of 128"
        tk = tile_k
        k_pad = _round_up(K, tk)           # zero-padded -> contributes 0
    else:
        tk = K                             # full (ragged-free) K block
        k_pad = K

    # --- N tiling: lane-dense (mult of 128); keep W2 resident if it fits -----
    n_pad = _round_up(out_dim, 128)
    w2_resident = (k_pad == K) and (2 * k_pad * n_pad * itemsize <= budget // 2)
    if w2_resident:
        tn = n_pad                         # grid_n == grid_k == 1 -> W2 DMA'd once
    else:
        tn = min(n_pad, max(max_tile_n, 128))
        tn = max(128, (tn // 128) * 128)

    # --- batch tiling: pad only to a multiple of 8, biggest tile that fits ---
    b_pad = _round_up(B, 8)
    tb = 8
    for cand in (1024, 512, 256, 128, 64, 32, 16, 8):
        c = min(cand, b_pad)
        if _block_vmem_bytes(c, tk, tn, itemsize) <= budget:
            tb = c
            break

    grid_b = pl.cdiv(b_pad, tb)
    grid_n = pl.cdiv(n_pad, tn)
    grid_k = k_pad // tk

    # v7x megacore: guarantee >=2 steps along a "parallel" axis when possible.
    if grid_b * grid_n == 1 and b_pad >= 16:
        tb = _round_up(pl.cdiv(b_pad, 2), 8)
        grid_b = pl.cdiv(b_pad, tb)

    # --- zero-pad operands only where actually needed -------------------------
    xp = x
    if b_pad != B or k_pad != K:
        xp = jnp.pad(x, ((0, b_pad - B), (0, k_pad - K)))
    w2p = w2
    if k_pad != K or n_pad != out_dim:
        w2p = jnp.pad(w2, ((0, k_pad - K), (0, n_pad - out_dim)))
    b2p = b2 if n_pad == out_dim else jnp.pad(b2, ((0, 0), (0, n_pad - out_dim)))

    if compute_dtype is not None:
        xp = xp.astype(compute_dtype)
        w2p = w2p.astype(compute_dtype)

    need = _block_vmem_bytes(tb, tk, tn, itemsize)
    vmem_limit = min(int(capacity * 0.75),
                     max(2 * need + (4 << 20), 16 << 20))

    out_padded = pl.pallas_call(
        _mlp_kernel,
        out_shape=jax.ShapeDtypeStruct((b_pad, n_pad), x.dtype),
        grid_spec=pltpu.PrefetchScalarGridSpec(
            num_scalar_prefetch=0,
            grid=(grid_b, grid_n, grid_k),
            in_specs=[
                pl.BlockSpec((tb, tk), lambda i, j, k: (i, k)),
                pl.BlockSpec((tk, tn), lambda i, j, k: (k, j)),
                pl.BlockSpec((1, tn), lambda i, j, k: (0, j)),
            ],
            out_specs=pl.BlockSpec((tb, tn), lambda i, j, k: (i, j)),
            scratch_shapes=[pltpu.VMEM((tb, tn), jnp.float32)],
        ),
        compiler_params=pltpu.CompilerParams(
            dimension_semantics=("parallel", "parallel", "arbitrary"),
            vmem_limit_bytes=vmem_limit,
        ),
    )(xp, w2p, b2p)

    if b_pad != B or n_pad != out_dim:
        return out_padded[:B, :out_dim]
    return out_padded


def init_params(key, input_size, output_size, dtype=jnp.float32):
    """PyTorch-style Linear init: U(-1/sqrt(fan_in), 1/sqrt(fan_in)).

    Returns (w1, b1, w2, b2) to mirror the module's parameters; only w2/b2
    are used by the forward pass (see the module-bug note above).
    """
    hidden = output_size // 2
    k1, k2, k3, k4 = jax.random.split(key, 4)

    bound1 = 1.0 / jnp.sqrt(jnp.array(input_size, dtype))
    w1 = jax.random.uniform(k1, (input_size, hidden), dtype, -bound1, bound1)
    b1 = jax.random.uniform(k2, (1, hidden), dtype, -bound1, bound1)

    bound2 = 1.0 / jnp.sqrt(jnp.array(hidden, dtype))
    w2 = jax.random.uniform(k3, (hidden, output_size), dtype, -bound2, bound2)
    b2 = jax.random.uniform(k4, (1, output_size), dtype, -bound2, bound2)
    return w1, b1, w2, b2


if __name__ == "__main__":
    key = jax.random.PRNGKey(0)

    def make_case(k, batch, input_size, output_size):
        kx, kp = jax.random.split(k)
        x = jax.random.normal(kx, (batch, input_size), jnp.float32)
        _, _, w2, b2 = init_params(kp, input_size, output_size)
        return x, w2, b2

    def ref_fwd(x, w2, b2):
        # Pure-JAX reference of the PyTorch forward: linear_2(dropout(x)).
        return jnp.dot(x, w2, precision=lax.Precision.HIGHEST) + b2

    k1, k2, k3 = jax.random.split(key, 3)

    # 1) Nominal tiny module shapes -> auto path (XLA fallback for tiny GEMM).
    x, w2, b2 = make_case(k1, 8, 16, 32)
    out = jax.block_until_ready(demographic_mlp(x, w2, b2))
    assert out.shape == (8, 32)
    assert jnp.allclose(out, ref_fwd(x, w2, b2), atol=1e-4, rtol=1e-4)

    # 2) Forced Pallas path: resident W2 (single N/K block, DMA'd once) and the
    #    batch split into two "parallel" steps (v7x megacore).
    x, w2, b2 = make_case(k2, 64, 16, 32)
    out = jax.block_until_ready(demographic_mlp(x, w2, b2, force_pallas=True))
    assert out.shape == (64, 32)
    assert jnp.allclose(out, ref_fwd(x, w2, b2), atol=1e-4, rtol=1e-4)

    # 3) Forced Pallas path exercising the K-tiled accumulator (grid_k = 2)
    #    and a ragged last batch block (B=50 -> b_pad=56, tile_b=32).
    x, w2, b2 = make_case(k3, 50, 256, 512)
    out = jax.block_until_ready(
        demographic_mlp(x, w2, b2, force_pallas=True,
                        tile_k=128, k_tiling_threshold=128))
    assert out.shape == (50, 512)
    assert jnp.allclose(out, ref_fwd(x, w2, b2), atol=1e-4, rtol=1e-4)

    # TODO(synk): stochastic dropout (p > 0, training mode) is not implemented;
    # the module is instantiated with dropout_rate=0.0 so dropout == identity.
    print("KERNEL_OK")
</pallas_src>

<mosaic_0001>
module attributes {stable_mosaic.version = 11 : i64} {
  func.func @_mlp_kernel(%arg0: i32, %arg1: i32, %arg2: i32, %arg3: memref<32x16xf32, #tpu.memory_space<vmem>>, %arg4: memref<16x128xf32, #tpu.memory_space<vmem>>, %arg5: memref<1x128xf32, #tpu.memory_space<vmem>>, %arg6: memref<32x128xf32, #tpu.memory_space<vmem>>, %arg7: memref<32x128xf32, #tpu.memory_space<vmem>>) attributes {dimension_semantics = [#tpu.dimension_semantics<parallel>, #tpu.dimension_semantics<parallel>, #tpu.dimension_semantics<arbitrary>], iteration_bounds = array<i64: 2, 1, 1>, scalar_prefetch = 0 : i64, scratch_operands = 1 : i64, tpu.core_type = #tpu.core_type<tc>, window_params = [{transform_indices = @transform_0, window_bounds = array<i64: 32, 16>}, {transform_indices = @transform_1, window_bounds = array<i64: 16, 128>}, {transform_indices = @transform_2, window_bounds = array<i64: 1, 128>}, {transform_indices = @transform_3, window_bounds = array<i64: 32, 128>}]} {
    %c0_i32 = arith.constant 0 : i32
    %0 = arith.cmpi eq, %arg2, %c0_i32 : i32
    %1 = arith.extui %0 : i1 to i32
    %c0_i32_0 = arith.constant 0 : i32
    %2 = arith.cmpi ne, %1, %c0_i32_0 : i32
    scf.if %2 {
      %c0_10 = arith.constant 0 : index
      %c0_11 = arith.constant 0 : index
      %12 = vector.load %arg5[%c0_10, %c0_11] : memref<1x128xf32, #tpu.memory_space<vmem>>, vector<1x128xf32>
      %13 = vector.shape_cast %12 : vector<1x128xf32> to vector<1x128xf32>
      %14 = vector.broadcast %13 : vector<1x128xf32> to vector<32x128xf32>
      %c0_12 = arith.constant 0 : index
      %c0_13 = arith.constant 0 : index
      %15 = vector.load %arg7[%c0_12, %c0_13] : memref<32x128xf32, #tpu.memory_space<vmem>>, vector<32x128xf32>
      tpu.vector_store %arg7[%c0_12, %c0_13], %14 {strides = array<i32>} : memref<32x128xf32, #tpu.memory_space<vmem>>, vector<32x128xf32>,
    } else {
    }
    %c0 = arith.constant 0 : index
    %c0_1 = arith.constant 0 : index
    %3 = vector.load %arg7[%c0, %c0_1] : memref<32x128xf32, #tpu.memory_space<vmem>>, vector<32x128xf32>
    %c0_2 = arith.constant 0 : index
    %c0_3 = arith.constant 0 : index
    %4 = vector.load %arg3[%c0_2, %c0_3] : memref<32x16xf32, #tpu.memory_space<vmem>>, vector<32x16xf32>
    %c0_4 = arith.constant 0 : index
    %c0_5 = arith.constant 0 : index
    %5 = vector.load %arg4[%c0_4, %c0_5] : memref<16x128xf32, #tpu.memory_space<vmem>>, vector<16x128xf32>
    %cst = arith.constant dense<0.000000e+00> : vector<32x128xf32>
    %6 = tpu.matmul %4, %5, %cst {dimension_numbers = #tpu.dot_dimension_numbers<[1], [0], [0], [1], [0, 0, 1, 1], [], []>} : vector<32x16xf32>, vector<16x128xf32>, vector<32x128xf32> -> vector<32x128xf32>
    %7 = arith.addf %3, %6 : vector<32x128xf32>
    %c0_6 = arith.constant 0 : index
    %c0_7 = arith.constant 0 : index
    %8 = vector.load %arg7[%c0_6, %c0_7] : memref<32x128xf32, #tpu.memory_space<vmem>>, vector<32x128xf32>
    tpu.vector_store %arg7[%c0_6, %c0_7], %7 {strides = array<i32>} : memref<32x128xf32, #tpu.memory_space<vmem>>, vector<32x128xf32>,
    %c0_i32_8 = arith.constant 0 : i32
    %9 = arith.cmpi eq, %arg2, %c0_i32_8 : i32
    %10 = arith.extui %9 : i1 to i32
    %c0_i32_9 = arith.constant 0 : i32
    %11 = arith.cmpi ne, %10, %c0_i32_9 : i32
    scf.if %11 {
      %c0_10 = arith.constant 0 : index
      %c0_11 = arith.constant 0 : index
      %12 = vector.load %arg7[%c0_10, %c0_11] : memref<32x128xf32, #tpu.memory_space<vmem>>, vector<32x128xf32>
      %c0_12 = arith.constant 0 : index
      %c0_13 = arith.constant 0 : index
      %13 = vector.load %arg6[%c0_12, %c0_13] : memref<32x128xf32, #tpu.memory_space<vmem>>, vector<32x128xf32>
      tpu.vector_store %arg6[%c0_12, %c0_13], %12 {strides = array<i32>} : memref<32x128xf32, #tpu.memory_space<vmem>>, vector<32x128xf32>,
    } else {
    }
    return
  }
  func.func @transform_0(%arg0: i32, %arg1: i32, %arg2: i32) -> (i32, i32) {
    %c0_i32 = arith.constant 0 : i32
    return %arg0, %arg2 : i32, i32
  }
  func.func @transform_1(%arg0: i32, %arg1: i32, %arg2: i32) -> (i32, i32) {
    %c0_i32 = arith.constant 0 : i32
    return %arg2, %arg1 : i32, i32
  }
  func.func @transform_2(%arg0: i32, %arg1: i32, %arg2: i32) -> (i32, i32) {
    %c0_i32 = arith.constant 0 : i32
    %c0_i32_0 = arith.constant 0 : i32
    return %c0_i32, %arg1 : i32, i32
  }
  func.func @transform_3(%arg0: i32, %arg1: i32, %arg2: i32) -> (i32, i32) {
    %c0_i32 = arith.constant 0 : i32
    return %arg0, %arg1 : i32, i32
  }
}

</mosaic_0001>

<llo_original>
// kernel: tpu_custom_call.1
$region0: #{tpu_custom_call.1}
  #allocation0 [shape = 'u32[]', space=smem, size = 0x4, offset = 0x4, fixed_abs, tag = 'smem constant byte address 0x4 - core index']
  #allocation1 [shape = 'u32[144,128]{1,0:T(1,128)}', space=vmem, size = 0x12000, scoped, tag = 'internal scratch']
  #allocation2 [shape = 'f32[32,128]{1,0:T(8,128)}', space=vmem, size = 0x4000, scoped, tag = 'scratch operand']
  %s0 = inlined_call_operand.vmem [shape: f32[64,16], index: 0, kind: input, shape index: {}]
  %s1 = inlined_call_operand.vmem [shape: f32[16,128], index: 1, kind: input, shape index: {}]
  %s2 = inlined_call_operand.vmem [shape: f32[1,128], index: 2, kind: input, shape index: {}]
  %s3 = inlined_call_operand.hbm [shape: f32[64,128], index: 3, kind: output, shape index: {}]
  %s4 = sld [smem:[#allocation0]]
  $region53: #{tpu_custom_call.1} parent=0
    _
  %s6 = ssub.s32 1, %s4
  %s7 = scalar_select 0, %s6, %s4
  $region1: #{tpu_custom_call.1} parent=0
    #allocation3 [shape = 'u8[32768]{0}', space=vmem, size = 0x8000, scoped, tag = 'output window, operand 0']
    #allocation4 [shape = 's32[2]{0}', space=sflag, size = 0x8, scoped, tag = 'scoped memory for tpu_custom_call.1']
    %8 = vsyncpa [#allocation4], 0
    %s9 = scalar_lea.sflag [#allocation4], 1
    %10 = vsyncpa %s9, 0
    loop: start=0, step=1, limit=4
    $region2: #{tpu_custom_call.1} parent=1 // loop_pre_header
      _
    $region3: #{tpu_custom_call.1} parent=1 // loop_header
      %s12 = sphi 0, %s16
      %p13 = scmp.ge.s32.totalorder %s12, 4
      %s19 = sphi 0, %s38
      %s20 = sphi 0, %s34
      %s21 = sphi 0, %s30
      %s22 = sphi 0, %s19
      %s23 = sphi 0, %s20
      %s24 = sphi 0, %s21
      %s25 = sphi 0, %s22
      %s26 = sphi 0, %s23
      %s27 = sphi 0, %s24
      %s43 = sphi 0, %s45
      %s46 = sphi 0, %s43
      %s47 = sphi 0, %s46
      %s63 = sphi 0, %s47
      %s71 = sphi 0, %s73
      %s74 = sphi 0, %s71
      %s75 = sphi 0, %s74
      %s91 = sphi 0, %s75
      %s97 = sphi 0, %s99
      %s100 = sphi 0, %s97
      %s101 = sphi 0, %s100
      %s117 = sphi 0, %s101
      %s125 = sphi 0, %s127
      %s128 = sphi 0, %s125
      %s129 = sphi 0, %s128
      %s145 = sphi 0, %s129
    $region4: #{tpu_custom_call.1} parent=1 // loop_header_branch
      %15 = sbr.rel (%p13) target = $region8
    $region5: #{tpu_custom_call.1} parent=1 // loop_body
      %s17 = ssub.s32 %s12, 1
      %s18 = ssub.s32 %s12, 2
      %s28 = sadd.s32 1, %s21
      %p29 = scmp.ge.s32.totalorder %s28, 1
      %s30 = scalar_select %p29, 0, %s28
      %s31 = sadd.s32 1, %s20
      %s32 = scalar_select %p29, %s31, %s20
      %p33 = scmp.ge.s32.totalorder %s32, 1
      %s34 = scalar_select %p33, 0, %s32
      %s35 = sadd.s32 1, %s19
      %s36 = scalar_select %p33, %s35, %s19
      %p37 = scmp.ge.s32.totalorder %s36, 2
      %s38 = scalar_select %p37, 0, %s36
      %s39 = ssub.s32 %s19, %s38
      %s40 = ssub.s32 %s21, %s30
      %s41 = sor.u32 %s39, %s40
      %p42 = scmp.eq.s32.totalorder %s41, 0
      %s44 = sadd.s32 %s43, 1
      %s45 = scalar_select %p42, %s43, %s44
      %p48 = pneg %p42
      %p49 = scmp.eq.s32.totalorder %s12, 1
      %p50 = por %p48, %p49
      %p51 = scmp.ne.s32.totalorder %s43, %s46
      %p52 = scmp.eq.s32.totalorder %s12, 0
      %p53 = por %p51, %p52
      %p54 = scmp.ne.s32.totalorder %s43, %s46
      %p55 = scmp.eq.s32.totalorder %s17, 1
      %p56 = por %p54, %p55
      %p57 = scmp.ne.s32.totalorder %s46, %s47
      %p58 = scmp.eq.s32.totalorder %s17, 0
      %p59 = por %p57, %p58
      %p60 = scmp.ne.s32.totalorder %s46, %s47
      %p61 = scmp.eq.s32.totalorder %s18, 1
      %p62 = por %p60, %p61
      %p64 = scmp.ne.s32.totalorder %s47, %s63
      %p65 = scmp.eq.s32.totalorder %s18, 0
      %p66 = por %p64, %p65
      %s67 = ssub.s32 %s21, %s30
      %s68 = ssub.s32 %s20, %s34
      %s69 = sor.u32 %s67, %s68
      %p70 = scmp.eq.s32.totalorder %s69, 0
      %s72 = sadd.s32 %s71, 1
      %s73 = scalar_select %p70, %s71, %s72
      %p76 = pneg %p70
      %p77 = scmp.eq.s32.totalorder %s12, 1
      %p78 = por %p76, %p77
      %p79 = scmp.ne.s32.totalorder %s71, %s74
      %p80 = scmp.eq.s32.totalorder %s12, 0
      %p81 = por %p79, %p80
      %p82 = scmp.ne.s32.totalorder %s71, %s74
      %p83 = scmp.eq.s32.totalorder %s17, 1
      %p84 = por %p82, %p83
      %p85 = scmp.ne.s32.totalorder %s74, %s75
      %p86 = scmp.eq.s32.totalorder %s17, 0
      %p87 = por %p85, %p86
      %p88 = scmp.ne.s32.totalorder %s74, %s75
      %p89 = scmp.eq.s32.totalorder %s18, 1
      %p90 = por %p88, %p89
      %p92 = scmp.ne.s32.totalorder %s75, %s91
      %p93 = scmp.eq.s32.totalorder %s18, 0
      %p94 = por %p92, %p93
      %s95 = ssub.s32 %s20, %s34
      %p96 = scmp.eq.s32.totalorder %s95, 0
      %s98 = sadd.s32 %s97, 1
      %s99 = scalar_select %p96, %s97, %s98
      %p102 = pneg %p96
      %p103 = scmp.eq.s32.totalorder %s12, 1
      %p104 = por %p102, %p103
      %p105 = scmp.ne.s32.totalorder %s97, %s100
      %p106 = scmp.eq.s32.totalorder %s12, 0
      %p107 = por %p105, %p106
      %p108 = scmp.ne.s32.totalorder %s97, %s100
      %p109 = scmp.eq.s32.totalorder %s17, 1
      %p110 = por %p108, %p109
      %p111 = scmp.ne.s32.totalorder %s100, %s101
      %p112 = scmp.eq.s32.totalorder %s17, 0
      %p113 = por %p111, %p112
      %p114 = scmp.ne.s32.totalorder %s100, %s101
      %p115 = scmp.eq.s32.totalorder %s18, 1
      %p116 = por %p114, %p115
      %p118 = scmp.ne.s32.totalorder %s101, %s117
      %p119 = scmp.eq.s32.totalorder %s18, 0
      %p120 = por %p118, %p119
      %s121 = ssub.s32 %s19, %s38
      %s122 = ssub.s32 %s20, %s34
      %s123 = sor.u32 %s121, %s122
      %p124 = scmp.eq.s32.totalorder %s123, 0
      %s126 = sadd.s32 %s125, 1
      %s127 = scalar_select %p124, %s125, %s126
      %p130 = pneg %p124
      %p131 = scmp.eq.s32.totalorder %s12, 1
      %p132 = por %p130, %p131
      %p133 = scmp.ne.s32.totalorder %s125, %s128
      %p134 = scmp.eq.s32.totalorder %s12, 0
      %p135 = por %p133, %p134
      %p136 = scmp.ne.s32.totalorder %s125, %s128
      %p137 = scmp.eq.s32.totalorder %s17, 1
      %p138 = por %p136, %p137
      %p139 = scmp.ne.s32.totalorder %s128, %s129
      %p140 = scmp.eq.s32.totalorder %s17, 0
      %p141 = por %p139, %p140
      %p142 = scmp.ne.s32.totalorder %s128, %s129
      %p143 = scmp.eq.s32.totalorder %s18, 1
      %p144 = por %p142, %p143
      %p146 = scmp.ne.s32.totalorder %s129, %s145
      %p147 = scmp.eq.s32.totalorder %s18, 0
      %p148 = por %p146, %p147
      %p149 = scmp.le.s32.totalorder 1, %s12
      %p150 = scmp.lt.s32.totalorder %s12, 3
      %p151 = pnand %p149, %p150
      %p152 = pneg %p151
      // Predicated region
      $region9: #{tpu_custom_call.1} parent=5 // pred_check
        _
      $region10: #{tpu_custom_call.1} parent=5 // pred_check_branch
        %154 = sbr.rel (%p151) target = $region12
      $region11: #{tpu_custom_call.1} parent=5 // pred_region
        %s155 = ssub.s32 %s12, 1
        // Predicated region
        $region13: #{tpu_custom_call.1} parent=11 // pred_check
          %p156 = pneg %p87
        $region14: #{tpu_custom_call.1} parent=11 // pred_check_branch
          %158 = sbr.rel (%p156) target = $region16
        $region15: #{tpu_custom_call.1} parent=11 // pred_region
          %s159 = smul.u32 2, %s24
          %p160 = scmp.lt.s32.totalorder %s159, 1
          %s161 = scalar_select %p160, %s159, 1
          %p162 = scmp.lt.s32.totalorder %s23, 0
          %s163 = scalar_select %p162, %s23, 0
          %s164 = sadd.s32 %s163, %s161
          %s165 = smul.addr %s164, 8
          %s166 = scalar_lea.vmem %s1, %s165
          %s167 = smul.u32 2, %s24
        $region16: #{tpu_custom_call.1} parent=11 // pred_fallthru
          _
        // Predicated region
        $region17: #{tpu_custom_call.1} parent=11 // pred_check
          %p168 = pneg %p113
        $region18: #{tpu_custom_call.1} parent=11 // pred_check_branch
          %170 = sbr.rel (%p168) target = $region20
        $region19: #{tpu_custom_call.1} parent=11 // pred_region
          %p171 = scmp.lt.s32.totalorder %s23, 0
          %s172 = scalar_select %p171, %s23, 0
          %s173 = scalar_lea.vmem %s2, %s172
        $region20: #{tpu_custom_call.1} parent=11 // pred_fallthru
          _
      $region12: #{tpu_custom_call.1} parent=5 // pred_fallthru
        _
      %p174 = scmp.lt.s32.totalorder %s12, 2
      // Predicated region
      $region21: #{tpu_custom_call.1} parent=5 // pred_check
        %p175 = pneg %p174
      $region22: #{tpu_custom_call.1} parent=5 // pred_check_branch
        %177 = sbr.rel (%p175) target = $region24
      $region23: #{tpu_custom_call.1} parent=5 // pred_region
        // Predicated region
        $region25: #{tpu_custom_call.1} parent=23 // pred_check
          %p178 = pneg %p53
        $region26: #{tpu_custom_call.1} parent=23 // pred_check_branch
          %180 = sbr.rel (%p178) target = $region28
        $region27: #{tpu_custom_call.1} parent=23 // pred_region
          %s181 = smul.u32 4, %s19
          %p182 = scmp.lt.s32.totalorder %s181, 7
          %s183 = scalar_select %p182, %s181, 7
          %p184 = scmp.lt.s32.totalorder %s21, 0
          %s185 = scalar_select %p184, %s21, 0
          %s186 = sadd.s32 %s185, %s183
          %s187 = smul.addr %s186, 8
          %s188 = scalar_lea.vmem %s0, %s187
          %s189 = smul.u32 4, %s19
        $region28: #{tpu_custom_call.1} parent=23 // pred_fallthru
          _
      $region24: #{tpu_custom_call.1} parent=5 // pred_fallthru
        _
      %p190 = scmp.le.s32.totalorder 1, %s12
      %p191 = scmp.lt.s32.totalorder %s12, 3
      %p192 = pnand %p190, %p191
      %p193 = pneg %p192
      // Predicated region
      $region29: #{tpu_custom_call.1} parent=5 // pred_check
        _
      $region30: #{tpu_custom_call.1} parent=5 // pred_check_branch
        %195 = sbr.rel (%p192) target = $region32
      $region31: #{tpu_custom_call.1} parent=5 // pred_region
        %s196 = ssub.s32 %s12, 1
        %s197 = smul.u32 4, %s22
        %p198 = scmp.lt.s32.totalorder %s197, 7
        %s199 = scalar_select %p198, %s197, 7
        %p200 = scmp.lt.s32.totalorder %s24, 0
        %s201 = scalar_select %p200, %s24, 0
        %s202 = sadd.s32 %s201, %s199
        %s203 = smul.addr %s202, 8
        %s204 = scalar_lea.vmem %s0, %s203
        %p205 = pneg %p59
        %p206 = pneg %p56
        %s207 = smul.u32 2, %s24
        %p208 = scmp.lt.s32.totalorder %s207, 1
        %s209 = scalar_select %p208, %s207, 1
        %p210 = scmp.lt.s32.totalorder %s23, 0
        %s211 = scalar_select %p210, %s23, 0
        %s212 = sadd.s32 %s211, %s209
        %s213 = smul.addr %s212, 8
        %s214 = scalar_lea.vmem %s1, %s213
        %p215 = pneg %p87
        %p216 = pneg %p84
        %p217 = scmp.lt.s32.totalorder %s23, 0
        %s218 = scalar_select %p217, %s23, 0
        %s219 = scalar_lea.vmem %s2, %s218
        %p220 = pneg %p113
        %p221 = pneg %p110
        %p222 = pneg %p141
        %p223 = pneg %p138
        %s224 = sand.u32 %s128, 1
        %s225 = scalar_lea.sflag [#allocation4], %s224
        %s226 = sand.u32 %s128, 1
        %s227 = smul.addr %s226, 32
        %s228 = scalar_lea.vmem [#allocation3], %s227
        %s229 = smul.u32 4, %s22
        %p230 = scmp.lt.s32.totalorder %s229, 7
        %s231 = scalar_select %p230, %s229, 7
        %p232 = scmp.lt.s32.totalorder %s24, 0
        %s233 = scalar_select %p232, %s24, 0
        %s234 = sadd.s32 %s233, %s231
        %s235 = smul.addr %s234, 8
        %s236 = scalar_lea.vmem %s0, %s235
        %s237 = smul.u32 4, %s22
        %s238 = smul.u32 2, %s24
        %p239 = scmp.lt.s32.totalorder %s238, 1
        %s240 = scalar_select %p239, %s238, 1
        %p241 = scmp.lt.s32.totalorder %s23, 0
        %s242 = scalar_select %p241, %s23, 0
        %s243 = sadd.s32 %s242, %s240
        %s244 = smul.addr %s243, 8
        %s245 = scalar_lea.vmem %s1, %s244
        %s246 = smul.u32 2, %s24
        %p247 = scmp.lt.s32.totalorder %s23, 0
        %s248 = scalar_select %p247, %s23, 0
        %s249 = scalar_lea.vmem %s2, %s248
        %s250 = smul.u32 4, %s22
        %p251 = scmp.eq.s32.totalorder %s24, 0
        // Predicated region
        $region33: #{tpu_custom_call.1} parent=31 // pred_check
          %p252 = pneg %p251
        $region34: #{tpu_custom_call.1} parent=31 // pred_check_branch
          %254 = sbr.rel (%p252) target = $region36
        $region35: #{tpu_custom_call.1} parent=31 // pred_region
          %v255 = vld [vmem:[%s249] sm:$0x1]
          %v257 = vlaneseq
          %v258 = vshrl.u32 %v257, 7
          %v259 = vsub.s32 0, %v258
          %v260 = vrot.slane %v255, %v259
          %262 = vst [vmem:[#allocation2] sm:$0xff] %v260
          %263 = vst [vmem:[#allocation2 + $0x8] sm:$0xff] %v260
          %264 = vst [vmem:[#allocation2 + $0x10] sm:$0xff] %v260
          %265 = vst [vmem:[#allocation2 + $0x18] sm:$0xff] %v260
        $region36: #{tpu_custom_call.1} parent=31 // pred_fallthru
          _
        %v266 = vld [vmem:[#allocation2] sm:$0xff]
        %v267 = vld [vmem:[#allocation2 + $0x8] sm:$0xff]
        %v268 = vld [vmem:[#allocation2 + $0x10] sm:$0xff]
        %v269 = vld [vmem:[#allocation2 + $0x18] sm:$0xff]
        %v270 = vld [vmem:[%s236] sm:$0xff]
        %v271 = vld [vmem:[%s236 + $0x8] sm:$0xff]
        %v272 = vld [vmem:[%s236 + $0x10] sm:$0xff]
        %v273 = vld [vmem:[%s236 + $0x18] sm:$0xff]
        %v274 = vld [vmem:[%s245] sm:$0xff]
        %v275 = vld [vmem:[%s245 + $0x8] sm:$0xff]
        %vm276 = vcmask 130048
        %v278 = vsel %vm276, %v270, 0
        %v281 = vsel %vm276, %v271, 0
        %v284 = vsel %vm276, %v272, 0
        %v287 = vsel %vm276, %v273, 0
        %289 = vmatprep.subr.mxu0 0.0
        %290 = vmatpush1.msra.mxu0 %v274
        %291 = vmatprep.subr.mxu0 0.0
        %292 = vmatpush1.msra.mxu0 %v275
        %293 = vmatprep.subr.mxu0 0.0
        %294 = vmatpush1.msra.mxu0 0.0
        %295 = vmatprep.subr.mxu0 0.0
        %296 = vmatpush1.msra.mxu0 0.0
        %297 = vmatprep.subr.mxu0 0.0
        %298 = vmatpush1.msra.mxu0 0.0
        %299 = vmatprep.subr.mxu0 0.0
        %300 = vmatpush1.msra.mxu0 0.0
        %301 = vmatprep.subr.mxu0 0.0
        %302 = vmatpush1.msra.mxu0 0.0
        %303 = vmatprep.subr.mxu0 0.0
        %304 = vmatpush1.msra.mxu0 0.0
        %305 = vmatprep.subr.mxu0 0.0
        %306 = vmatpush1.msra.mxu0 0.0
        %307 = vmatprep.subr.mxu0 0.0
        %308 = vmatpush1.msra.mxu0 0.0
        %309 = vmatprep.subr.mxu0 0.0
        %310 = vmatpush1.msra.mxu0 0.0
        %311 = vmatprep.subr.mxu0 0.0
        %312 = vmatpush1.msra.mxu0 0.0
        %313 = vmatprep.subr.mxu0 0.0
        %314 = vmatpush1.msra.mxu0 0.0
        %315 = vmatprep.subr.mxu0 0.0
        %316 = vmatpush1.msra.mxu0 0.0
        %317 = vmatprep.subr.mxu0 0.0
        %318 = vmatpush1.msra.mxu0 0.0
        %319 = vmatprep.subr.mxu0 0.0
        %320 = vmatpush1.msra.mxu0 0.0
        %321 = vmatprep.subr.mxu0 0.0
        %322 = vmatpush1.msra.mxu0 0.0
        %323 = vmatprep.subr.mxu0 0.0
        %324 = vmatpush1.msra.mxu0 0.0
        %325 = vmatprep.subr.mxu0 0.0
        %326 = vmatpush1.msra.mxu0 0.0
        %327 = vmatprep.subr.mxu0 0.0
        %328 = vmatpush1.msra.mxu0 0.0
        %329 = vmatprep.subr.mxu0 0.0
        %330 = vmatpush1.msra.mxu0 0.0
        %331 = vmatprep.subr.mxu0 0.0
        %332 = vmatpush1.msra.mxu0 0.0
        %333 = vmatprep.subr.mxu0 0.0
        %334 = vmatpush1.msra.mxu0 0.0
        %335 = vmatprep.subr.mxu0 0.0
        %336 = vmatpush1.msra.mxu0 0.0
        %337 = vmatprep.subr.mxu0 0.0
        %338 = vmatpush1.msra.mxu0 0.0
        %339 = vmatprep.subr.mxu0 0.0
        %340 = vmatpush1.msra.mxu0 0.0
        %341 = vmatprep.subr.mxu0 0.0
        %342 = vmatpush1.msra.mxu0 0.0
        %343 = vmatprep.subr.mxu0 0.0
        %344 = vmatpush1.msra.mxu0 0.0
        %345 = vmatprep.subr.mxu0 0.0
        %346 = vmatpush1.msra.mxu0 0.0
        %347 = vmatprep.subr.mxu0 0.0
        %348 = vmatpush1.msra.mxu0 0.0
        %349 = vmatprep.subr.mxu0 0.0
        %350 = vmatpush1.msra.mxu0 0.0
        %351 = vmatprep.subr.mxu0 0.0
        %352 = vmatpush1.msra.mxu0 0.0
        %353 = vmatprep.mubr.f32.mxu0 0.0
        %354 = vmatmul.mubr.f32.gmra.mrb[0].mxu0 %v278
        %v355 = vpop.f32.mrb[0].mxu0
        %v356 = vadd.f32 0.0, %v355
        %v357 = vpop.f32.mrb[0].mxu0
        %358 = vmatprep.mubr.f32.mxu0 0.0
        %359 = vmatmul.mubr.f32.gmra.mrb[0].mxu0 %v281
        %v360 = vpop.f32.mrb[0].mxu0
        %v361 = vadd.f32 0.0, %v360
        %v362 = vpop.f32.mrb[0].mxu0
        %363 = vmatprep.mubr.f32.mxu0 0.0
        %364 = vmatmul.mubr.f32.gmra.mrb[0].mxu0 %v284
        %v365 = vpop.f32.mrb[0].mxu0
        %v366 = vadd.f32 0.0, %v365
        %v367 = vpop.f32.mrb[0].mxu0
        %368 = vmatprep.mubr.f32.mxu0 0.0
        %369 = vmatmul.mubr.f32.gmra.mrb[0].mxu0 %v287
        %v370 = vpop.f32.mrb[0].mxu0
        %v371 = vadd.f32 0.0, %v370
        %v372 = vpop.f32.mrb[0].mxu0
        %373 = vdwg.mxu0
        %v374 = vadd.f32 %v266, %v356
        %v375 = vadd.f32 %v267, %v361
        %v376 = vadd.f32 %v268, %v366
        %v377 = vadd.f32 %v269, %v371
        %378 = vst [vmem:[#allocation2] sm:$0xff] %v374
        %379 = vst [vmem:[#allocation2 + $0x8] sm:$0xff] %v375
        %380 = vst [vmem:[#allocation2 + $0x10] sm:$0xff] %v376
        %381 = vst [vmem:[#allocation2 + $0x18] sm:$0xff] %v377
        // Predicated region
        $region37: #{tpu_custom_call.1} parent=31 // pred_check
          %p382 = pneg %p251
        $region38: #{tpu_custom_call.1} parent=31 // pred_check_branch
          %384 = sbr.rel (%p382) target = $region40
        $region39: #{tpu_custom_call.1} parent=31 // pred_region
          %v385 = vld [vmem:[#allocation2] sm:$0xff]
          %v386 = vld [vmem:[#allocation2 + $0x8] sm:$0xff]
          %v387 = vld [vmem:[#allocation2 + $0x10] sm:$0xff]
          %v388 = vld [vmem:[#allocation2 + $0x18] sm:$0xff]
          %389 = vst [vmem:[%s228] sm:$0xff] %v385
          %390 = vst [vmem:[%s228 + $0x8] sm:$0xff] %v386
          %391 = vst [vmem:[%s228 + $0x10] sm:$0xff] %v387
          %392 = vst [vmem:[%s228 + $0x18] sm:$0xff] %v388
        $region40: #{tpu_custom_call.1} parent=31 // pred_fallthru
          _
        %s393 = sand.u32 %s128, 1
        %s394 = scalar_lea.sflag [#allocation4], %s393
        %s395 = sand.u32 %s128, 1
        %s396 = smul.addr %s395, 32
        %s397 = scalar_lea.vmem [#allocation3], %s396
        // Predicated region
        $region41: #{tpu_custom_call.1} parent=31 // pred_check
          %p398 = pneg %p138
        $region42: #{tpu_custom_call.1} parent=31 // pred_check_branch
          %400 = sbr.rel (%p398) target = $region44
        $region43: #{tpu_custom_call.1} parent=31 // pred_region
          %s401 = smul.u32 4, %s22
          %s403 = ssub.s32 512, 512
          %404 = vsyncadd %s394, %s403
          %s405 = sadd.s32 %s23, %s401
          %s406 = smul.addr %s405, 128
          %s407 = scalar_lea.hbm %s3, %s406
          %s408 = sshll.u32 %s397, 4
          %s409 = int_to_ptr.vmem [resolvable:$true] %s408
          %414 = dma.vmem_to_hbm [thread:$0]  %s409, 512, %s407, %s394, 128, 128, 8
        $region44: #{tpu_custom_call.1} parent=31 // pred_fallthru
          _
      $region32: #{tpu_custom_call.1} parent=5 // pred_fallthru
        _
      %p415 = scmp.le.s32.totalorder 2, %s12
      // Predicated region
      $region45: #{tpu_custom_call.1} parent=5 // pred_check
        %p416 = pneg %p415
      $region46: #{tpu_custom_call.1} parent=5 // pred_check_branch
        %418 = sbr.rel (%p416) target = $region48
      $region47: #{tpu_custom_call.1} parent=5 // pred_region
        %s419 = ssub.s32 %s12, 2
        // Predicated region
        $region49: #{tpu_custom_call.1} parent=47 // pred_check
          %p420 = pneg %p144
        $region50: #{tpu_custom_call.1} parent=47 // pred_check_branch
          %422 = sbr.rel (%p420) target = $region52
        $region51: #{tpu_custom_call.1} parent=47 // pred_region
          %s423 = sand.u32 %s129, 1
          %s424 = scalar_lea.sflag [#allocation4], %s423
          %s425 = sand.u32 %s129, 1
          %s426 = smul.addr %s425, 32
          %s427 = scalar_lea.vmem [#allocation3], %s426
          %428 = dma.done %s424, 512
        $region52: #{tpu_custom_call.1} parent=47 // pred_fallthru
          _
      $region48: #{tpu_custom_call.1} parent=5 // pred_fallthru
        _
    $region6: #{tpu_custom_call.1} parent=1 // loop_footer
      %s16 = sadd.s32 1, %s12
    $region7: #{tpu_custom_call.1} parent=1 // loop_footer_branch
      %11 = sbr.rel target = $region3
    $region8: #{tpu_custom_call.1} parent=1 // loop_exit
      _
    %429 = vsyncpa [#allocation4], 1
    %s430 = scalar_lea.sflag [#allocation4], 1
    %431 = vsyncpa %s430, 1

</llo_original>
